<compile_context>
chip_gen: v7x
topology: tpu7x:2x2x1
jax: 0.10.0
libtpu: 0.0.40
codegen_flags: <defaults>
</compile_context>

<pallas_src>
import jax
import jax.numpy as jnp
from jax.experimental import pallas as pl
from jax.experimental.pallas import tpu as pltpu


def _round_up(n, m):
    return -(-n // m) * m


def _make_kernel(n_layers, n_parameters):
    """n_layers = number of nn.Linear layers = len(n_hidden) + 1 (>= 2)."""
    P = n_parameters

    def kernel(theta0_ref, theta1_ref, x_ref, *refs):
        n_param_refs = 5 + 3 * (n_layers - 2) + 2
        p_refs = refs[:n_param_refs]
        out_ref = refs[n_param_refs]

        w1a = p_refs[0][...]          # (P, H1)
        w1b = p_refs[1][...]          # (P, H1)
        w1x = p_refs[2][...]          # (O, H1)
        b1 = p_refs[3][...]           # (1, H1)
        w1abT = p_refs[4][...]        # (H1, 2P) = [W1a^T | W1b^T]
        mids = p_refs[5:5 + 3 * (n_layers - 2)]   # (W_k, b_k, W_k^T) for k=2..L-1
        wLT = p_refs[-2][...]         # (1, H_{L-1})  last-layer weight, pre-transposed
        bL = p_refs[-1][...]          # (1, 1)

        th0 = theta0_ref[...]
        th1 = theta1_ref[...]
        xx = x_ref[...]
        T = th0.shape[0]

        def theta_dot(th, W):
            # (T,P)@(P,H1) with tiny K=P: VPU broadcast-multiply-adds, keeps
            # the MXU free for the real dots.
            acc = th[:, 0:1] * W[0:1, :]
            for p in range(1, P):
                acc = acc + th[:, p:p + 1] * W[p:p + 1, :]
            return acc

        # ---- first layer: shared x term once, both orderings, then stack ----
        z_x = jnp.dot(xx, w1x, preferred_element_type=jnp.float32) + b1
        h_01 = theta_dot(th0, w1a) + theta_dot(th1, w1b) + z_x   # ordering (th0, th1)
        h_10 = theta_dot(th1, w1a) + theta_dot(th0, w1b) + z_x   # ordering (th1, th0)
        h = jnp.concatenate([h_01, h_10], axis=0)                # (2T, H1)

        # ---- layers 2..L-1 run ONCE on the stacked 2T batch ----
        acts = []
        for k in range(2, n_layers):
            a = jnp.tanh(h)
            acts.append(a)
            W = mids[3 * (k - 2)][...]
            b = mids[3 * (k - 2) + 1][...]
            h = jnp.dot(a, W, preferred_element_type=jnp.float32) + b

        # ---- last layer: N=1 matmul replaced by mul + lane reduction ----
        a_last = jnp.tanh(h)
        acts.append(a_last)
        f = jnp.sum(a_last * wLT, axis=-1, keepdims=True) + bL   # (2T, 1)

        # ---- backward to the first-layer pre-activation (upstream grad = 1) ----
        # seed ones @ W_L^T == broadcast of the pre-transposed last-layer row.
        g = wLT * (1.0 - a_last * a_last)                        # dF/dz_{L-1}
        for k in range(n_layers - 1, 1, -1):
            WkT = mids[3 * (k - 2) + 2][...]                     # (H_k, H_{k-1})
            a_prev = acts[k - 2]
            g = jnp.dot(g, WkT, preferred_element_type=jnp.float32)
            g = g * (1.0 - a_prev * a_prev)
        # g == dF/dz_1 (2T, H1); both theta maps in a single dot:
        g_ab = jnp.dot(g, w1abT, preferred_element_type=jnp.float32)  # (2T, 2P)

        f1, f2 = f[:T], f[T:]
        g1a, g1b = g_ab[:T, :P], g_ab[:T, P:]
        g2a, g2b = g_ab[T:, :P], g_ab[T:, P:]

        log_r = f1 - f2
        # stable sigmoid(-log_r) == 1 / (1 + exp(log_r)); single exp on EUP.
        e = jnp.exp(-jnp.abs(log_r))
        s_hat = jnp.where(log_r >= 0, e / (1.0 + e), 1.0 / (1.0 + e))

        t0 = g1a - g2b                 # d log_r / d theta0
        t1 = g1b - g2a                 # d log_r / d theta1

        # single lane-dense packed store: [s_hat | log_r | t0 | t1]
        out_ref[...] = jnp.concatenate([s_hat, log_r, t0, t1], axis=-1)

    return kernel


def _prepare_kernel_params(params):
    """params = [W1a, W1b, W1x, b1, W2, b2, ..., WL, bL] (in,out layout).

    Returns the kernel param list with host-side pre-transposed copies so the
    kernel never does an in-kernel `.T`.
    """
    W1a, W1b, W1x, b1 = params[:4]
    rest = params[4:]
    n_layers = len(rest) // 2 + 1
    assert n_layers >= 2, "need at least one hidden layer"

    kparams = [W1a, W1b, W1x, b1, jnp.concatenate([W1a.T, W1b.T], axis=1)]
    for k in range(2, n_layers):                      # intermediate layers
        W = rest[2 * (k - 2)]
        b = rest[2 * (k - 2) + 1]
        kparams += [W, b, W.T]
    WL, bL = rest[-2], rest[-1]                        # last layer (H,1), (1,1)
    kparams += [WL.T, bL]                              # (1, H), (1, 1)
    return kparams, n_layers


def ratio_model_forward(theta0, theta1, x, params, block_b=1024):
    """Returns (s_hat, log_r_hat, t_hat0, t_hat1), matching the PyTorch module."""
    B, P = theta0.shape
    O = x.shape[1]
    kparams, n_layers = _prepare_kernel_params(params)

    # batch tile: whole (8-padded) batch if small, else `block_b` rows,
    # pipelined & megacore-parallel over the grid.
    block_b = max(8, (block_b // 8) * 8)
    b8 = _round_up(B, 8)
    if b8 <= block_b:
        tile, Bp = b8, b8
    else:
        tile = block_b
        Bp = _round_up(B, tile)
    if Bp != B:
        pad = Bp - B
        theta0 = jnp.pad(theta0, ((0, pad), (0, 0)))
        theta1 = jnp.pad(theta1, ((0, pad), (0, 0)))
        x = jnp.pad(x, ((0, pad), (0, 0)))

    n_out = 2 + 2 * P
    grid = (Bp // tile,)

    in_specs = [
        pl.BlockSpec((tile, P), lambda i: (i, 0)),
        pl.BlockSpec((tile, P), lambda i: (i, 0)),
        pl.BlockSpec((tile, O), lambda i: (i, 0)),
    ]
    # weights: full-array blocks, constant index_map -> stay resident in VMEM.
    for pmat in kparams:
        in_specs.append(pl.BlockSpec(pmat.shape, lambda i: (0, 0)))

    out_spec = pl.BlockSpec((tile, n_out), lambda i: (i, 0))
    out_shape = jax.ShapeDtypeStruct((Bp, n_out), jnp.float32)

    kernel = _make_kernel(n_layers, P)
    packed = pl.pallas_call(
        kernel,
        grid=grid,
        in_specs=in_specs,
        out_specs=out_spec,
        out_shape=out_shape,
        compiler_params=pltpu.CompilerParams(
            dimension_semantics=("parallel",)),
    )(theta0, theta1, x, *kparams)

    packed = packed[:B]
    s_hat = packed[:, 0:1]
    log_r = packed[:, 1:2]
    t0 = packed[:, 2:2 + P]
    t1 = packed[:, 2 + P:2 + 2 * P]
    return s_hat, log_r, t0, t1


def init_params(key, n_observables, n_parameters, n_hidden):
    """Deterministic PyTorch-style Linear init, weights stored as (in, out)."""
    params = []
    n_last = n_observables + 2 * n_parameters
    sizes = list(n_hidden) + [1]
    for li, n_out in enumerate(sizes):
        key, kw, kb = jax.random.split(key, 3)
        bound = 1.0 / jnp.sqrt(n_last)
        W = jax.random.uniform(kw, (n_last, n_out), jnp.float32, -bound, bound)
        b = jax.random.uniform(kb, (1, n_out), jnp.float32, -bound, bound)
        if li == 0:
            # split the first-layer weight along its input axis
            params += [W[:n_parameters],
                       W[n_parameters:2 * n_parameters],
                       W[2 * n_parameters:],
                       b]
        else:
            params += [W, b]
        n_last = n_out
    return params


def _reference(theta0, theta1, x, params):
    """Pure-JAX reference (uses jax.grad for the score)."""
    W1a, W1b, W1x, b1 = params[:4]
    rest = params[4:]

    def f(th_a, th_b, xx):
        h = th_a @ W1a + th_b @ W1b + xx @ W1x + b1
        for l in range(len(rest) // 2):
            h = jnp.tanh(h)
            h = h @ rest[2 * l] + rest[2 * l + 1]
        return h

    log_r = f(theta0, theta1, x) - f(theta1, theta0, x)
    s_hat = 1.0 / (1.0 + jnp.exp(log_r))

    def log_r_sum(t0, t1):
        return jnp.sum(f(t0, t1, x) - f(t1, t0, x))

    t0 = jax.grad(log_r_sum, argnums=0)(theta0, theta1)
    t1 = jax.grad(log_r_sum, argnums=1)(theta0, theta1)
    return s_hat, log_r, t0, t1


if __name__ == "__main__":
    # TODO(synk): dropout (dropout_prob>0), non-tanh activations, and
    # return_grad_x=True are not exercised (off by default in the module).
    n_observables = 24
    n_parameters = 4
    n_hidden = (32, 32)
    batch = 8

    key = jax.random.PRNGKey(0)
    k_p, k_t0, k_t1, k_x = jax.random.split(key, 4)
    params = init_params(k_p, n_observables, n_parameters, n_hidden)
    theta0 = jax.random.normal(k_t0, (batch, n_parameters), jnp.float32)
    theta1 = jax.random.normal(k_t1, (batch, n_parameters), jnp.float32)
    x = jax.random.normal(k_x, (batch, n_observables), jnp.float32)

    outs = ratio_model_forward(theta0, theta1, x, params)
    outs = jax.block_until_ready(outs)

    refs = _reference(theta0, theta1, x, params)
    names = ("s_hat", "log_r_hat", "t_hat0", "t_hat1")
    for name, o, r in zip(names, outs, refs):
        assert jnp.allclose(o, r, atol=1e-5, rtol=1e-5), (name, o, r)

    print("KERNEL_OK")
</pallas_src>

<mosaic_0001>
module attributes {stable_mosaic.version = 11 : i64} {
  func.func @kernel(%arg0: i32, %arg1: memref<8x4xf32, #tpu.memory_space<vmem>>, %arg2: memref<8x4xf32, #tpu.memory_space<vmem>>, %arg3: memref<8x24xf32, #tpu.memory_space<vmem>>, %arg4: memref<4x32xf32, #tpu.memory_space<vmem>>, %arg5: memref<4x32xf32, #tpu.memory_space<vmem>>, %arg6: memref<24x32xf32, #tpu.memory_space<vmem>>, %arg7: memref<1x32xf32, #tpu.memory_space<vmem>>, %arg8: memref<32x8xf32, #tpu.memory_space<vmem>>, %arg9: memref<32x32xf32, #tpu.memory_space<vmem>>, %arg10: memref<1x32xf32, #tpu.memory_space<vmem>>, %arg11: memref<32x32xf32, #tpu.memory_space<vmem>>, %arg12: memref<1x32xf32, #tpu.memory_space<vmem>>, %arg13: memref<1x1xf32, #tpu.memory_space<vmem>>, %arg14: memref<8x10xf32, #tpu.memory_space<vmem>>) attributes {dimension_semantics = [#tpu.dimension_semantics<parallel>], iteration_bounds = array<i64: 1>, scalar_prefetch = 0 : i64, scratch_operands = 0 : i64, tpu.core_type = #tpu.core_type<tc>, window_params = [{transform_indices = @transform_0, window_bounds = array<i64: 8, 4>}, {transform_indices = @transform_1, window_bounds = array<i64: 8, 4>}, {transform_indices = @transform_2, window_bounds = array<i64: 8, 24>}, {pipeline_mode = #tpu.pipeline_mode<synchronous>, transform_indices = @transform_3, window_bounds = array<i64: 4, 32>}, {pipeline_mode = #tpu.pipeline_mode<synchronous>, transform_indices = @transform_4, window_bounds = array<i64: 4, 32>}, {pipeline_mode = #tpu.pipeline_mode<synchronous>, transform_indices = @transform_5, window_bounds = array<i64: 24, 32>}, {pipeline_mode = #tpu.pipeline_mode<synchronous>, transform_indices = @transform_6, window_bounds = array<i64: 1, 32>}, {pipeline_mode = #tpu.pipeline_mode<synchronous>, transform_indices = @transform_7, window_bounds = array<i64: 32, 8>}, {pipeline_mode = #tpu.pipeline_mode<synchronous>, transform_indices = @transform_8, window_bounds = array<i64: 32, 32>}, {pipeline_mode = #tpu.pipeline_mode<synchronous>, transform_indices = @transform_9, window_bounds = array<i64: 1, 32>}, {pipeline_mode = #tpu.pipeline_mode<synchronous>, transform_indices = @transform_10, window_bounds = array<i64: 32, 32>}, {pipeline_mode = #tpu.pipeline_mode<synchronous>, transform_indices = @transform_11, window_bounds = array<i64: 1, 32>}, {pipeline_mode = #tpu.pipeline_mode<synchronous>, transform_indices = @transform_12, window_bounds = array<i64: 1, 1>}, {transform_indices = @transform_13, window_bounds = array<i64: 8, 10>}]} {
    %c0 = arith.constant 0 : index
    %c0_0 = arith.constant 0 : index
    %0 = vector.load %arg4[%c0, %c0_0] : memref<4x32xf32, #tpu.memory_space<vmem>>, vector<4x32xf32>
    %c0_1 = arith.constant 0 : index
    %c0_2 = arith.constant 0 : index
    %1 = vector.load %arg5[%c0_1, %c0_2] : memref<4x32xf32, #tpu.memory_space<vmem>>, vector<4x32xf32>
    %c0_3 = arith.constant 0 : index
    %c0_4 = arith.constant 0 : index
    %2 = vector.load %arg6[%c0_3, %c0_4] : memref<24x32xf32, #tpu.memory_space<vmem>>, vector<24x32xf32>
    %c0_5 = arith.constant 0 : index
    %c0_6 = arith.constant 0 : index
    %3 = vector.load %arg7[%c0_5, %c0_6] : memref<1x32xf32, #tpu.memory_space<vmem>>, vector<1x32xf32>
    %c0_7 = arith.constant 0 : index
    %c0_8 = arith.constant 0 : index
    %4 = vector.load %arg8[%c0_7, %c0_8] : memref<32x8xf32, #tpu.memory_space<vmem>>, vector<32x8xf32>
    %c0_9 = arith.constant 0 : index
    %c0_10 = arith.constant 0 : index
    %5 = vector.load %arg12[%c0_9, %c0_10] : memref<1x32xf32, #tpu.memory_space<vmem>>, vector<1x32xf32>
    %c0_11 = arith.constant 0 : index
    %c0_12 = arith.constant 0 : index
    %6 = vector.load %arg13[%c0_11, %c0_12] : memref<1x1xf32, #tpu.memory_space<vmem>>, vector<1x1xf32>
    %c0_13 = arith.constant 0 : index
    %c0_14 = arith.constant 0 : index
    %7 = vector.load %arg1[%c0_13, %c0_14] : memref<8x4xf32, #tpu.memory_space<vmem>>, vector<8x4xf32>
    %c0_15 = arith.constant 0 : index
    %c0_16 = arith.constant 0 : index
    %8 = vector.load %arg2[%c0_15, %c0_16] : memref<8x4xf32, #tpu.memory_space<vmem>>, vector<8x4xf32>
    %c0_17 = arith.constant 0 : index
    %c0_18 = arith.constant 0 : index
    %9 = vector.load %arg3[%c0_17, %c0_18] : memref<8x24xf32, #tpu.memory_space<vmem>>, vector<8x24xf32>
    %cst = arith.constant dense<0.000000e+00> : vector<8x32xf32>
    %10 = tpu.matmul %9, %2, %cst {dimension_numbers = #tpu.dot_dimension_numbers<[1], [0], [0], [1], [0, 0, 1, 1], [], []>} : vector<8x24xf32>, vector<24x32xf32>, vector<8x32xf32> -> vector<8x32xf32>
    %11 = vector.broadcast %3 : vector<1x32xf32> to vector<8x32xf32>
    %12 = arith.addf %10, %11 : vector<8x32xf32>
    %13 = vector.extract_strided_slice %7 {offsets = [0, 0], sizes = [8, 1], strides = [1, 1]} : vector<8x4xf32> to vector<8x1xf32>
    %14 = vector.extract_strided_slice %0 {offsets = [0, 0], sizes = [1, 32], strides = [1, 1]} : vector<4x32xf32> to vector<1x32xf32>
    %15 = vector.broadcast %13 : vector<8x1xf32> to vector<8x32xf32>
    %16 = vector.broadcast %14 : vector<1x32xf32> to vector<8x32xf32>
    %17 = arith.mulf %15, %16 : vector<8x32xf32>
    %18 = vector.extract_strided_slice %7 {offsets = [0, 1], sizes = [8, 1], strides = [1, 1]} : vector<8x4xf32> to vector<8x1xf32>
    %19 = vector.extract_strided_slice %0 {offsets = [1, 0], sizes = [1, 32], strides = [1, 1]} : vector<4x32xf32> to vector<1x32xf32>
    %20 = vector.broadcast %18 : vector<8x1xf32> to vector<8x32xf32>
    %21 = vector.broadcast %19 : vector<1x32xf32> to vector<8x32xf32>
    %22 = arith.mulf %20, %21 : vector<8x32xf32>
    %23 = arith.addf %17, %22 : vector<8x32xf32>
    %24 = vector.extract_strided_slice %7 {offsets = [0, 2], sizes = [8, 1], strides = [1, 1]} : vector<8x4xf32> to vector<8x1xf32>
    %25 = vector.extract_strided_slice %0 {offsets = [2, 0], sizes = [1, 32], strides = [1, 1]} : vector<4x32xf32> to vector<1x32xf32>
    %26 = vector.broadcast %24 : vector<8x1xf32> to vector<8x32xf32>
    %27 = vector.broadcast %25 : vector<1x32xf32> to vector<8x32xf32>
    %28 = arith.mulf %26, %27 : vector<8x32xf32>
    %29 = arith.addf %23, %28 : vector<8x32xf32>
    %30 = vector.extract_strided_slice %7 {offsets = [0, 3], sizes = [8, 1], strides = [1, 1]} : vector<8x4xf32> to vector<8x1xf32>
    %31 = vector.extract_strided_slice %0 {offsets = [3, 0], sizes = [1, 32], strides = [1, 1]} : vector<4x32xf32> to vector<1x32xf32>
    %32 = vector.broadcast %30 : vector<8x1xf32> to vector<8x32xf32>
    %33 = vector.broadcast %31 : vector<1x32xf32> to vector<8x32xf32>
    %34 = arith.mulf %32, %33 : vector<8x32xf32>
    %35 = arith.addf %29, %34 : vector<8x32xf32>
    %36 = vector.extract_strided_slice %8 {offsets = [0, 0], sizes = [8, 1], strides = [1, 1]} : vector<8x4xf32> to vector<8x1xf32>
    %37 = vector.extract_strided_slice %1 {offsets = [0, 0], sizes = [1, 32], strides = [1, 1]} : vector<4x32xf32> to vector<1x32xf32>
    %38 = vector.broadcast %36 : vector<8x1xf32> to vector<8x32xf32>
    %39 = vector.broadcast %37 : vector<1x32xf32> to vector<8x32xf32>
    %40 = arith.mulf %38, %39 : vector<8x32xf32>
    %41 = vector.extract_strided_slice %8 {offsets = [0, 1], sizes = [8, 1], strides = [1, 1]} : vector<8x4xf32> to vector<8x1xf32>
    %42 = vector.extract_strided_slice %1 {offsets = [1, 0], sizes = [1, 32], strides = [1, 1]} : vector<4x32xf32> to vector<1x32xf32>
    %43 = vector.broadcast %41 : vector<8x1xf32> to vector<8x32xf32>
    %44 = vector.broadcast %42 : vector<1x32xf32> to vector<8x32xf32>
    %45 = arith.mulf %43, %44 : vector<8x32xf32>
    %46 = arith.addf %40, %45 : vector<8x32xf32>
    %47 = vector.extract_strided_slice %8 {offsets = [0, 2], sizes = [8, 1], strides = [1, 1]} : vector<8x4xf32> to vector<8x1xf32>
    %48 = vector.extract_strided_slice %1 {offsets = [2, 0], sizes = [1, 32], strides = [1, 1]} : vector<4x32xf32> to vector<1x32xf32>
    %49 = vector.broadcast %47 : vector<8x1xf32> to vector<8x32xf32>
    %50 = vector.broadcast %48 : vector<1x32xf32> to vector<8x32xf32>
    %51 = arith.mulf %49, %50 : vector<8x32xf32>
    %52 = arith.addf %46, %51 : vector<8x32xf32>
    %53 = vector.extract_strided_slice %8 {offsets = [0, 3], sizes = [8, 1], strides = [1, 1]} : vector<8x4xf32> to vector<8x1xf32>
    %54 = vector.extract_strided_slice %1 {offsets = [3, 0], sizes = [1, 32], strides = [1, 1]} : vector<4x32xf32> to vector<1x32xf32>
    %55 = vector.broadcast %53 : vector<8x1xf32> to vector<8x32xf32>
    %56 = vector.broadcast %54 : vector<1x32xf32> to vector<8x32xf32>
    %57 = arith.mulf %55, %56 : vector<8x32xf32>
    %58 = arith.addf %52, %57 : vector<8x32xf32>
    %59 = arith.addf %35, %58 : vector<8x32xf32>
    %60 = arith.addf %59, %12 : vector<8x32xf32>
    %61 = vector.extract_strided_slice %8 {offsets = [0, 0], sizes = [8, 1], strides = [1, 1]} : vector<8x4xf32> to vector<8x1xf32>
    %62 = vector.extract_strided_slice %0 {offsets = [0, 0], sizes = [1, 32], strides = [1, 1]} : vector<4x32xf32> to vector<1x32xf32>
    %63 = vector.broadcast %61 : vector<8x1xf32> to vector<8x32xf32>
    %64 = vector.broadcast %62 : vector<1x32xf32> to vector<8x32xf32>
    %65 = arith.mulf %63, %64 : vector<8x32xf32>
    %66 = vector.extract_strided_slice %8 {offsets = [0, 1], sizes = [8, 1], strides = [1, 1]} : vector<8x4xf32> to vector<8x1xf32>
    %67 = vector.extract_strided_slice %0 {offsets = [1, 0], sizes = [1, 32], strides = [1, 1]} : vector<4x32xf32> to vector<1x32xf32>
    %68 = vector.broadcast %66 : vector<8x1xf32> to vector<8x32xf32>
    %69 = vector.broadcast %67 : vector<1x32xf32> to vector<8x32xf32>
    %70 = arith.mulf %68, %69 : vector<8x32xf32>
    %71 = arith.addf %65, %70 : vector<8x32xf32>
    %72 = vector.extract_strided_slice %8 {offsets = [0, 2], sizes = [8, 1], strides = [1, 1]} : vector<8x4xf32> to vector<8x1xf32>
    %73 = vector.extract_strided_slice %0 {offsets = [2, 0], sizes = [1, 32], strides = [1, 1]} : vector<4x32xf32> to vector<1x32xf32>
    %74 = vector.broadcast %72 : vector<8x1xf32> to vector<8x32xf32>
    %75 = vector.broadcast %73 : vector<1x32xf32> to vector<8x32xf32>
    %76 = arith.mulf %74, %75 : vector<8x32xf32>
    %77 = arith.addf %71, %76 : vector<8x32xf32>
    %78 = vector.extract_strided_slice %8 {offsets = [0, 3], sizes = [8, 1], strides = [1, 1]} : vector<8x4xf32> to vector<8x1xf32>
    %79 = vector.extract_strided_slice %0 {offsets = [3, 0], sizes = [1, 32], strides = [1, 1]} : vector<4x32xf32> to vector<1x32xf32>
    %80 = vector.broadcast %78 : vector<8x1xf32> to vector<8x32xf32>
    %81 = vector.broadcast %79 : vector<1x32xf32> to vector<8x32xf32>
    %82 = arith.mulf %80, %81 : vector<8x32xf32>
    %83 = arith.addf %77, %82 : vector<8x32xf32>
    %84 = vector.extract_strided_slice %7 {offsets = [0, 0], sizes = [8, 1], strides = [1, 1]} : vector<8x4xf32> to vector<8x1xf32>
    %85 = vector.extract_strided_slice %1 {offsets = [0, 0], sizes = [1, 32], strides = [1, 1]} : vector<4x32xf32> to vector<1x32xf32>
    %86 = vector.broadcast %84 : vector<8x1xf32> to vector<8x32xf32>
    %87 = vector.broadcast %85 : vector<1x32xf32> to vector<8x32xf32>
    %88 = arith.mulf %86, %87 : vector<8x32xf32>
    %89 = vector.extract_strided_slice %7 {offsets = [0, 1], sizes = [8, 1], strides = [1, 1]} : vector<8x4xf32> to vector<8x1xf32>
    %90 = vector.extract_strided_slice %1 {offsets = [1, 0], sizes = [1, 32], strides = [1, 1]} : vector<4x32xf32> to vector<1x32xf32>
    %91 = vector.broadcast %89 : vector<8x1xf32> to vector<8x32xf32>
    %92 = vector.broadcast %90 : vector<1x32xf32> to vector<8x32xf32>
    %93 = arith.mulf %91, %92 : vector<8x32xf32>
    %94 = arith.addf %88, %93 : vector<8x32xf32>
    %95 = vector.extract_strided_slice %7 {offsets = [0, 2], sizes = [8, 1], strides = [1, 1]} : vector<8x4xf32> to vector<8x1xf32>
    %96 = vector.extract_strided_slice %1 {offsets = [2, 0], sizes = [1, 32], strides = [1, 1]} : vector<4x32xf32> to vector<1x32xf32>
    %97 = vector.broadcast %95 : vector<8x1xf32> to vector<8x32xf32>
    %98 = vector.broadcast %96 : vector<1x32xf32> to vector<8x32xf32>
    %99 = arith.mulf %97, %98 : vector<8x32xf32>
    %100 = arith.addf %94, %99 : vector<8x32xf32>
    %101 = vector.extract_strided_slice %7 {offsets = [0, 3], sizes = [8, 1], strides = [1, 1]} : vector<8x4xf32> to vector<8x1xf32>
    %102 = vector.extract_strided_slice %1 {offsets = [3, 0], sizes = [1, 32], strides = [1, 1]} : vector<4x32xf32> to vector<1x32xf32>
    %103 = vector.broadcast %101 : vector<8x1xf32> to vector<8x32xf32>
    %104 = vector.broadcast %102 : vector<1x32xf32> to vector<8x32xf32>
    %105 = arith.mulf %103, %104 : vector<8x32xf32>
    %106 = arith.addf %100, %105 : vector<8x32xf32>
    %107 = arith.addf %83, %106 : vector<8x32xf32>
    %108 = arith.addf %107, %12 : vector<8x32xf32>
    %109 = tpu.concatenate %60, %108 in 0 : vector<8x32xf32>, vector<8x32xf32> -> vector<16x32xf32>
    %110 = math.tanh %109 : vector<16x32xf32>
    %c0_19 = arith.constant 0 : index
    %c0_20 = arith.constant 0 : index
    %111 = vector.load %arg9[%c0_19, %c0_20] : memref<32x32xf32, #tpu.memory_space<vmem>>, vector<32x32xf32>
    %c0_21 = arith.constant 0 : index
    %c0_22 = arith.constant 0 : index
    %112 = vector.load %arg10[%c0_21, %c0_22] : memref<1x32xf32, #tpu.memory_space<vmem>>, vector<1x32xf32>
    %cst_23 = arith.constant dense<0.000000e+00> : vector<16x32xf32>
    %113 = tpu.matmul %110, %111, %cst_23 {dimension_numbers = #tpu.dot_dimension_numbers<[1], [0], [0], [1], [0, 0, 1, 1], [], []>} : vector<16x32xf32>, vector<32x32xf32>, vector<16x32xf32> -> vector<16x32xf32>
    %114 = vector.broadcast %112 : vector<1x32xf32> to vector<16x32xf32>
    %115 = arith.addf %113, %114 : vector<16x32xf32>
    %116 = math.tanh %115 : vector<16x32xf32>
    %117 = vector.broadcast %5 : vector<1x32xf32> to vector<16x32xf32>
    %118 = arith.mulf %116, %117 : vector<16x32xf32>
    %cst_24 = arith.constant dense<0.000000e+00> : vector<16xf32>
    %119 = vector.multi_reduction <add>, %118, %cst_24 [1] : vector<16x32xf32> to vector<16xf32>
    %120 = vector.shape_cast %119 : vector<16xf32> to vector<16x1xf32>
    %121 = vector.broadcast %6 : vector<1x1xf32> to vector<16x1xf32>
    %122 = arith.addf %120, %121 : vector<16x1xf32>
    %123 = arith.mulf %116, %116 : vector<16x32xf32>
    %cst_25 = arith.constant 1.000000e+00 : f32
    %124 = vector.broadcast %cst_25 : f32 to vector<16x32xf32>
    %125 = arith.subf %124, %123 : vector<16x32xf32>
    %126 = vector.broadcast %5 : vector<1x32xf32> to vector<16x32xf32>
    %127 = arith.mulf %126, %125 : vector<16x32xf32>
    %c0_26 = arith.constant 0 : index
    %c0_27 = arith.constant 0 : index
    %128 = vector.load %arg11[%c0_26, %c0_27] : memref<32x32xf32, #tpu.memory_space<vmem>>, vector<32x32xf32>
    %cst_28 = arith.constant dense<0.000000e+00> : vector<16x32xf32>
    %129 = tpu.matmul %127, %128, %cst_28 {dimension_numbers = #tpu.dot_dimension_numbers<[1], [0], [0], [1], [0, 0, 1, 1], [], []>} : vector<16x32xf32>, vector<32x32xf32>, vector<16x32xf32> -> vector<16x32xf32>
    %130 = arith.mulf %110, %110 : vector<16x32xf32>
    %cst_29 = arith.constant 1.000000e+00 : f32
    %131 = vector.broadcast %cst_29 : f32 to vector<16x32xf32>
    %132 = arith.subf %131, %130 : vector<16x32xf32>
    %133 = arith.mulf %129, %132 : vector<16x32xf32>
    %cst_30 = arith.constant dense<0.000000e+00> : vector<16x8xf32>
    %134 = tpu.matmul %133, %4, %cst_30 {dimension_numbers = #tpu.dot_dimension_numbers<[1], [0], [0], [1], [0, 0, 1, 1], [], []>} : vector<16x32xf32>, vector<32x8xf32>, vector<16x8xf32> -> vector<16x8xf32>
    %135 = vector.extract_strided_slice %122 {offsets = [0, 0], sizes = [8, 1], strides = [1, 1]} : vector<16x1xf32> to vector<8x1xf32>
    %136 = vector.extract_strided_slice %122 {offsets = [8, 0], sizes = [8, 1], strides = [1, 1]} : vector<16x1xf32> to vector<8x1xf32>
    %137 = vector.extract_strided_slice %134 {offsets = [0, 0], sizes = [8, 4], strides = [1, 1]} : vector<16x8xf32> to vector<8x4xf32>
    %138 = vector.extract_strided_slice %134 {offsets = [0, 4], sizes = [8, 4], strides = [1, 1]} : vector<16x8xf32> to vector<8x4xf32>
    %139 = vector.extract_strided_slice %134 {offsets = [8, 0], sizes = [8, 4], strides = [1, 1]} : vector<16x8xf32> to vector<8x4xf32>
    %140 = vector.extract_strided_slice %134 {offsets = [8, 4], sizes = [8, 4], strides = [1, 1]} : vector<16x8xf32> to vector<8x4xf32>
    %141 = arith.subf %135, %136 : vector<8x1xf32>
    %142 = math.absf %141 : vector<8x1xf32>
    %cst_31 = arith.constant 0.000000e+00 : f32
    %143 = vector.broadcast %cst_31 : f32 to vector<8x1xf32>
    %144 = arith.subf %143, %142 : vector<8x1xf32>
    %145 = math.exp %144 : vector<8x1xf32>
    %cst_32 = arith.constant 0.000000e+00 : f32
    %146 = vector.broadcast %cst_32 : f32 to vector<8x1xf32>
    %147 = arith.cmpf oge, %141, %146 : vector<8x1xf32>
    %cst_33 = arith.constant 1.000000e+00 : f32
    %148 = vector.broadcast %cst_33 : f32 to vector<8x1xf32>
    %149 = arith.addf %148, %145 : vector<8x1xf32>
    %150 = arith.divf %145, %149 : vector<8x1xf32>
    %cst_34 = arith.constant 1.000000e+00 : f32
    %151 = vector.broadcast %cst_34 : f32 to vector<8x1xf32>
    %152 = arith.addf %151, %145 : vector<8x1xf32>
    %cst_35 = arith.constant 1.000000e+00 : f32
    %153 = vector.broadcast %cst_35 : f32 to vector<8x1xf32>
    %154 = arith.divf %153, %152 : vector<8x1xf32>
    %155 = arith.select %147, %150, %154 : vector<8x1xi1>, vector<8x1xf32>
    %156 = arith.subf %137, %140 : vector<8x4xf32>
    %157 = arith.subf %138, %139 : vector<8x4xf32>
    %158 = tpu.concatenate %155, %141, %156, %157 in 1 : vector<8x1xf32>, vector<8x1xf32>, vector<8x4xf32>, vector<8x4xf32> -> vector<8x10xf32>
    %c0_36 = arith.constant 0 : index
    %c0_37 = arith.constant 0 : index
    %159 = vector.load %arg14[%c0_36, %c0_37] : memref<8x10xf32, #tpu.memory_space<vmem>>, vector<8x10xf32>
    tpu.vector_store %arg14[%c0_36, %c0_37], %158 {strides = array<i32>} : memref<8x10xf32, #tpu.memory_space<vmem>>, vector<8x10xf32>,
    return
  }
  func.func @transform_0(%arg0: i32) -> (i32, i32) {
    %c0_i32 = arith.constant 0 : i32
    %c0_i32_0 = arith.constant 0 : i32
    return %arg0, %c0_i32 : i32, i32
  }
  func.func @transform_1(%arg0: i32) -> (i32, i32) {
    %c0_i32 = arith.constant 0 : i32
    %c0_i32_0 = arith.constant 0 : i32
    return %arg0, %c0_i32 : i32, i32
  }
  func.func @transform_2(%arg0: i32) -> (i32, i32) {
    %c0_i32 = arith.constant 0 : i32
    %c0_i32_0 = arith.constant 0 : i32
    return %arg0, %c0_i32 : i32, i32
  }
  func.func @transform_3(%arg0: i32) -> (i32, i32) {
    %c0_i32 = arith.constant 0 : i32
    %c0_i32_0 = arith.constant 0 : i32
    %c0_i32_1 = arith.constant 0 : i32
    return %c0_i32, %c0_i32_0 : i32, i32
  }
  func.func @transform_4(%arg0: i32) -> (i32, i32) {
    %c0_i32 = arith.constant 0 : i32
    %c0_i32_0 = arith.constant 0 : i32
    %c0_i32_1 = arith.constant 0 : i32
    return %c0_i32, %c0_i32_0 : i32, i32
  }
  func.func @transform_5(%arg0: i32) -> (i32, i32) {
    %c0_i32 = arith.constant 0 : i32
    %c0_i32_0 = arith.constant 0 : i32
    %c0_i32_1 = arith.constant 0 : i32
    return %c0_i32, %c0_i32_0 : i32, i32
  }
  func.func @transform_6(%arg0: i32) -> (i32, i32) {
    %c0_i32 = arith.constant 0 : i32
    %c0_i32_0 = arith.constant 0 : i32
    %c0_i32_1 = arith.constant 0 : i32
    return %c0_i32, %c0_i32_0 : i32, i32
  }
  func.func @transform_7(%arg0: i32) -> (i32, i32) {
    %c0_i32 = arith.constant 0 : i32
    %c0_i32_0 = arith.constant 0 : i32
    %c0_i32_1 = arith.constant 0 : i32
    return %c0_i32, %c0_i32_0 : i32, i32
  }
  func.func @transform_8(%arg0: i32) -> (i32, i32) {
    %c0_i32 = arith.constant 0 : i32
    %c0_i32_0 = arith.constant 0 : i32
    %c0_i32_1 = arith.constant 0 : i32
    return %c0_i32, %c0_i32_0 : i32, i32
  }
  func.func @transform_9(%arg0: i32) -> (i32, i32) {
    %c0_i32 = arith.constant 0 : i32
    %c0_i32_0 = arith.constant 0 : i32
    %c0_i32_1 = arith.constant 0 : i32
    return %c0_i32, %c0_i32_0 : i32, i32
  }
  func.func @transform_10(%arg0: i32) -> (i32, i32) {
    %c0_i32 = arith.constant 0 : i32
    %c0_i32_0 = arith.constant 0 : i32
    %c0_i32_1 = arith.constant 0 : i32
    return %c0_i32, %c0_i32_0 : i32, i32
  }
  func.func @transform_11(%arg0: i32) -> (i32, i32) {
    %c0_i32 = arith.constant 0 : i32
    %c0_i32_0 = arith.constant 0 : i32
    %c0_i32_1 = arith.constant 0 : i32
    return %c0_i32, %c0_i32_0 : i32, i32
  }
  func.func @transform_12(%arg0: i32) -> (i32, i32) {
    %c0_i32 = arith.constant 0 : i32
    %c0_i32_0 = arith.constant 0 : i32
    %c0_i32_1 = arith.constant 0 : i32
    return %c0_i32, %c0_i32_0 : i32, i32
  }
  func.func @transform_13(%arg0: i32) -> (i32, i32) {
    %c0_i32 = arith.constant 0 : i32
    %c0_i32_0 = arith.constant 0 : i32
    return %arg0, %c0_i32 : i32, i32
  }
}

</mosaic_0001>

<llo_original>
// kernel: tpu_custom_call.1
$region0: #{tpu_custom_call.1}
  #allocation0 [shape = 'u32[]', space=smem, size = 0x4, offset = 0x4, fixed_abs, tag = 'smem constant byte address 0x4 - core index']
  #allocation1 [shape = 'u32[144,128]{1,0:T(1,128)}', space=vmem, size = 0x12000, scoped, tag = 'internal scratch']
  #allocation2 [shape = 'f32[1,1]{1,0:T(1,128)S(1)}', space=vmem, size = 0x200, scoped, tag = 'scoped memory for tpu_custom_call.1']
  %s0 = inlined_call_operand.vmem [shape: f32[8,4], index: 0, kind: input, shape index: {}]
  %s1 = inlined_call_operand.vmem [shape: f32[8,4], index: 1, kind: input, shape index: {}]
  %s2 = inlined_call_operand.hbm [shape: f32[8,24], index: 2, kind: input, shape index: {}]
  %s3 = inlined_call_operand.vmem [shape: f32[4,32], index: 3, kind: input, shape index: {}]
  %s4 = inlined_call_operand.vmem [shape: f32[4,32], index: 4, kind: input, shape index: {}]
  %s5 = inlined_call_operand.hbm [shape: f32[24,32], index: 5, kind: input, shape index: {}]
  %s6 = inlined_call_operand.vmem [shape: f32[1,32], index: 6, kind: input, shape index: {}]
  %s7 = inlined_call_operand.vmem [shape: f32[32,8], index: 7, kind: input, shape index: {}]
  %s8 = inlined_call_operand.vmem [shape: f32[32,32], index: 8, kind: input, shape index: {}]
  %s9 = inlined_call_operand.vmem [shape: f32[1,32], index: 9, kind: input, shape index: {}]
  %s10 = inlined_call_operand.vmem [shape: f32[32,32], index: 10, kind: input, shape index: {}]
  %s11 = inlined_call_operand.vmem [shape: f32[1,32], index: 11, kind: input, shape index: {}]
  %s12 = inlined_call_operand.<no memory space> [shape: f32[1,1], index: 12, kind: input, shape index: {}]
  %s13 = inlined_call_operand.hbm [shape: f32[8,10], index: 13, kind: output, shape index: {}]
  %s14 = sld [smem:[#allocation0]]
  $region70: #{tpu_custom_call.1} parent=0
    _
  %s16 = ssub.s32 1, %s14
  %s17 = scalar_select 0, %s16, %s14
  %v18 = vstv %s12
  %19 = vst [vmem:[#allocation2] sm:$0x1] %v18
  $region1: #{tpu_custom_call.1} parent=0
    #allocation3 [shape = 'u8[4096]{0}', space=vmem, size = 0x1000, scoped, tag = 'input window, operand 2, single buffered']
    #allocation4 [shape = 's32[1]{0}', space=sflag, size = 0x4, scoped, tag = 'scoped memory for tpu_custom_call.1']
    #allocation5 [shape = 's32[1]{0}', space=sflag, size = 0x4, scoped, tag = 'scoped memory for tpu_custom_call.1']
    #allocation6 [shape = 'u8[12288]{0}', space=vmem, size = 0x3000, scoped, tag = 'input window, operand 5, single buffered']
    #allocation7 [shape = 's32[1]{0}', space=sflag, size = 0x4, scoped, tag = 'scoped memory for tpu_custom_call.1']
    #allocation8 [shape = 'u8[4096]{0}', space=vmem, size = 0x1000, scoped, tag = 'output window, operand 0, single buffered']
    %20 = vsyncpa [#allocation4], 0
    %21 = vsyncpa [#allocation7], 0
    %22 = vsyncpa [#allocation5], 0
    // Predicated region
    $region2: #{tpu_custom_call.1} parent=1 // pred_check
      _
    $region3: #{tpu_custom_call.1} parent=1 // pred_check_branch
      %24 = sbr.rel (0) target = $region5
    $region4: #{tpu_custom_call.1} parent=1 // pred_region
      _
    $region5: #{tpu_custom_call.1} parent=1 // pred_fallthru
      _
    // Predicated region
    $region6: #{tpu_custom_call.1} parent=1 // pred_check
      _
    $region7: #{tpu_custom_call.1} parent=1 // pred_check_branch
      %26 = sbr.rel (0) target = $region9
    $region8: #{tpu_custom_call.1} parent=1 // pred_region
      _
    $region9: #{tpu_custom_call.1} parent=1 // pred_fallthru
      _
    // Predicated region
    $region10: #{tpu_custom_call.1} parent=1 // pred_check
      _
    $region11: #{tpu_custom_call.1} parent=1 // pred_check_branch
      %28 = sbr.rel (0) target = $region13
    $region12: #{tpu_custom_call.1} parent=1 // pred_region
      %s30 = ssub.s32 128, 128
      %31 = vsyncadd [#allocation4], %s30
      %s33 = sshll.u32 [#allocation3], 4
      %s34 = int_to_ptr.vmem [resolvable:$true] %s33
      %36 = dma.hbm_to_vmem [thread:$0]  %s2, 128, %s34, [#allocation4]
    $region13: #{tpu_custom_call.1} parent=1 // pred_fallthru
      _
    // Predicated region
    $region14: #{tpu_custom_call.1} parent=1 // pred_check
      _
    $region15: #{tpu_custom_call.1} parent=1 // pred_check_branch
      %38 = sbr.rel (0) target = $region17
    $region16: #{tpu_custom_call.1} parent=1 // pred_region
      _
    $region17: #{tpu_custom_call.1} parent=1 // pred_fallthru
      _
    // Predicated region
    $region18: #{tpu_custom_call.1} parent=1 // pred_check
      _
    $region19: #{tpu_custom_call.1} parent=1 // pred_check_branch
      %40 = sbr.rel (0) target = $region21
    $region20: #{tpu_custom_call.1} parent=1 // pred_region
      _
    $region21: #{tpu_custom_call.1} parent=1 // pred_fallthru
      _
    // Predicated region
    $region22: #{tpu_custom_call.1} parent=1 // pred_check
      _
    $region23: #{tpu_custom_call.1} parent=1 // pred_check_branch
      %42 = sbr.rel (0) target = $region25
    $region24: #{tpu_custom_call.1} parent=1 // pred_region
      %s44 = ssub.s32 384, 384
      %45 = vsyncadd [#allocation7], %s44
      %s46 = sshll.u32 [#allocation6], 4
      %s47 = int_to_ptr.vmem [resolvable:$true] %s46
      %52 = dma.hbm_to_vmem [thread:$0]  %s5, 384, %s47, [#allocation7], 128, 128, 8
    $region25: #{tpu_custom_call.1} parent=1 // pred_fallthru
      _
    // Predicated region
    $region26: #{tpu_custom_call.1} parent=1 // pred_check
      _
    $region27: #{tpu_custom_call.1} parent=1 // pred_check_branch
      %54 = sbr.rel (0) target = $region29
    $region28: #{tpu_custom_call.1} parent=1 // pred_region
      _
    $region29: #{tpu_custom_call.1} parent=1 // pred_fallthru
      _
    // Predicated region
    $region30: #{tpu_custom_call.1} parent=1 // pred_check
      _
    $region31: #{tpu_custom_call.1} parent=1 // pred_check_branch
      %56 = sbr.rel (0) target = $region33
    $region32: #{tpu_custom_call.1} parent=1 // pred_region
      _
    $region33: #{tpu_custom_call.1} parent=1 // pred_fallthru
      _
    // Predicated region
    $region34: #{tpu_custom_call.1} parent=1 // pred_check
      _
    $region35: #{tpu_custom_call.1} parent=1 // pred_check_branch
      %58 = sbr.rel (0) target = $region37
    $region36: #{tpu_custom_call.1} parent=1 // pred_region
      _
    $region37: #{tpu_custom_call.1} parent=1 // pred_fallthru
      _
    // Predicated region
    $region38: #{tpu_custom_call.1} parent=1 // pred_check
      _
    $region39: #{tpu_custom_call.1} parent=1 // pred_check_branch
      %60 = sbr.rel (0) target = $region41
    $region40: #{tpu_custom_call.1} parent=1 // pred_region
      _
    $region41: #{tpu_custom_call.1} parent=1 // pred_fallthru
      _
    // Predicated region
    $region42: #{tpu_custom_call.1} parent=1 // pred_check
      _
    $region43: #{tpu_custom_call.1} parent=1 // pred_check_branch
      %62 = sbr.rel (0) target = $region45
    $region44: #{tpu_custom_call.1} parent=1 // pred_region
      _
    $region45: #{tpu_custom_call.1} parent=1 // pred_fallthru
      _
    // Predicated region
    $region46: #{tpu_custom_call.1} parent=1 // pred_check
      _
    $region47: #{tpu_custom_call.1} parent=1 // pred_check_branch
      %64 = sbr.rel (0) target = $region49
    $region48: #{tpu_custom_call.1} parent=1 // pred_region
      _
    $region49: #{tpu_custom_call.1} parent=1 // pred_fallthru
      _
    // Predicated region
    $region50: #{tpu_custom_call.1} parent=1 // pred_check
      _
    $region51: #{tpu_custom_call.1} parent=1 // pred_check_branch
      %66 = sbr.rel (0) target = $region53
    $region52: #{tpu_custom_call.1} parent=1 // pred_region
      _
    $region53: #{tpu_custom_call.1} parent=1 // pred_fallthru
      _
    // Predicated region
    $region54: #{tpu_custom_call.1} parent=1 // pred_check
      _
    $region55: #{tpu_custom_call.1} parent=1 // pred_check_branch
      %68 = sbr.rel (0) target = $region57
    $region56: #{tpu_custom_call.1} parent=1 // pred_region
      %69 = dma.done [#allocation4], 128
    $region57: #{tpu_custom_call.1} parent=1 // pred_fallthru
      _
    // Predicated region
    $region58: #{tpu_custom_call.1} parent=1 // pred_check
      _
    $region59: #{tpu_custom_call.1} parent=1 // pred_check_branch
      %71 = sbr.rel (0) target = $region61
    $region60: #{tpu_custom_call.1} parent=1 // pred_region
      %72 = dma.done [#allocation7], 384
    $region61: #{tpu_custom_call.1} parent=1 // pred_fallthru
      _
    %v73 = vld [vmem:[%s3] sm:$0xf]
    %v74 = vld [vmem:[%s4] sm:$0xf]
    %v75 = vld [vmem:[#allocation6] sm:$0xff]
    %v76 = vld [vmem:[#allocation6 + $0x8] sm:$0xff]
    %v77 = vld [vmem:[#allocation6 + $0x10] sm:$0xff]
    %v78 = vld [vmem:[%s6] sm:$0x1]
    %v79 = vld [vmem:[%s7] sm:$0xff]
    %v80 = vld [vmem:[%s7 + $0x8] sm:$0xff]
    %v81 = vld [vmem:[%s7 + $0x10] sm:$0xff]
    %v82 = vld [vmem:[%s7 + $0x18] sm:$0xff]
    %v83 = vld [vmem:[%s11] sm:$0x1]
    %v84 = vld [vmem:[#allocation2] sm:$0x1]
    %v85 = vld [vmem:[%s0] sm:$0xff]
    %v86 = vld [vmem:[%s1] sm:$0xff]
    %v87 = vld [vmem:[#allocation3] sm:$0xff]
    %v89 = vlaneseq
    %v90 = vshrl.u32 %v89, 7
    %v91 = vsub.s32 0, %v90
    %v92 = vrot.slane %v78, %v91
    %vm94 = vcmask 195584
    %v96 = vsel %vm94, %v87, 0
    %98 = vmatprep.subr.mxu0 0.0
    %99 = vmatpush1.msra.mxu0 %v75
    %100 = vmatprep.subr.mxu0 0.0
    %101 = vmatpush1.msra.mxu0 %v76
    %102 = vmatprep.subr.mxu0 0.0
    %103 = vmatpush1.msra.mxu0 %v77
    %104 = vmatprep.subr.mxu0 0.0
    %105 = vmatpush1.msra.mxu0 0.0
    %106 = vmatprep.subr.mxu0 0.0
    %107 = vmatpush1.msra.mxu0 0.0
    %108 = vmatprep.subr.mxu0 0.0
    %109 = vmatpush1.msra.mxu0 0.0
    %110 = vmatprep.subr.mxu0 0.0
    %111 = vmatpush1.msra.mxu0 0.0
    %112 = vmatprep.subr.mxu0 0.0
    %113 = vmatpush1.msra.mxu0 0.0
    %114 = vmatprep.subr.mxu0 0.0
    %115 = vmatpush1.msra.mxu0 0.0
    %116 = vmatprep.subr.mxu0 0.0
    %117 = vmatpush1.msra.mxu0 0.0
    %118 = vmatprep.subr.mxu0 0.0
    %119 = vmatpush1.msra.mxu0 0.0
    %120 = vmatprep.subr.mxu0 0.0
    %121 = vmatpush1.msra.mxu0 0.0
    %122 = vmatprep.subr.mxu0 0.0
    %123 = vmatpush1.msra.mxu0 0.0
    %124 = vmatprep.subr.mxu0 0.0
    %125 = vmatpush1.msra.mxu0 0.0
    %126 = vmatprep.subr.mxu0 0.0
    %127 = vmatpush1.msra.mxu0 0.0
    %128 = vmatprep.subr.mxu0 0.0
    %129 = vmatpush1.msra.mxu0 0.0
    %130 = vmatprep.subr.mxu0 0.0
    %131 = vmatpush1.msra.mxu0 0.0
    %132 = vmatprep.subr.mxu0 0.0
    %133 = vmatpush1.msra.mxu0 0.0
    %134 = vmatprep.subr.mxu0 0.0
    %135 = vmatpush1.msra.mxu0 0.0
    %136 = vmatprep.subr.mxu0 0.0
    %137 = vmatpush1.msra.mxu0 0.0
    %138 = vmatprep.subr.mxu0 0.0
    %139 = vmatpush1.msra.mxu0 0.0
    %140 = vmatprep.subr.mxu0 0.0
    %141 = vmatpush1.msra.mxu0 0.0
    %142 = vmatprep.subr.mxu0 0.0
    %143 = vmatpush1.msra.mxu0 0.0
    %144 = vmatprep.subr.mxu0 0.0
    %145 = vmatpush1.msra.mxu0 0.0
    %146 = vmatprep.subr.mxu0 0.0
    %147 = vmatpush1.msra.mxu0 0.0
    %148 = vmatprep.subr.mxu0 0.0
    %149 = vmatpush1.msra.mxu0 0.0
    %150 = vmatprep.subr.mxu0 0.0
    %151 = vmatpush1.msra.mxu0 0.0
    %152 = vmatprep.subr.mxu0 0.0
    %153 = vmatpush1.msra.mxu0 0.0
    %154 = vmatprep.subr.mxu0 0.0
    %155 = vmatpush1.msra.mxu0 0.0
    %156 = vmatprep.subr.mxu0 0.0
    %157 = vmatpush1.msra.mxu0 0.0
    %158 = vmatprep.subr.mxu0 0.0
    %159 = vmatpush1.msra.mxu0 0.0
    %160 = vmatprep.subr.mxu0 0.0
    %161 = vmatpush1.msra.mxu0 0.0
    %162 = vmatprep.mubr.f32.mxu0 0.0
    %163 = vmatmul.mubr.f32.gmra.mrb[0].mxu0 %v96
    %v164 = vpop.f32.mrb[0].mxu0
    %v165 = vadd.f32 %v92, %v164
    %v166 = vpop.f32.mrb[0].mxu0
    %167 = vdwg.mxu0
    %169 = vset.pattern.permute.xlu0 0
    %170 = vperm.xlu0 %169, %v85
    %v171 = vpop.permute.xlu0 %170
    %v173 = vlaneseq
    %v174 = vshrl.u32 %v173, 7
    %v175 = vsub.s32 0, %v174
    %v176 = vrot.slane %v73, %v175
    %v177 = vmul.f32 %v171, %v176
    %178 = vset.pattern.permute.xlu0 1
    %179 = vperm.xlu0 %178, %v85
    %v180 = vpop.permute.xlu0 %179
    %v182 = vlaneseq
    %v183 = vshrl.u32 %v182, 7
    %v184 = vsub.s32 1, %v183
    %v185 = vrot.slane %v73, %v184
    %v186 = vmul.f32 %v180, %v185
    %v187 = vadd.f32 %v177, %v186
    %188 = vset.pattern.permute.xlu0 2
    %189 = vperm.xlu0 %188, %v85
    %v190 = vpop.permute.xlu0 %189
    %v192 = vlaneseq
    %v193 = vshrl.u32 %v192, 7
    %v194 = vsub.s32 2, %v193
    %v195 = vrot.slane %v73, %v194
    %v196 = vmul.f32 %v190, %v195
    %v197 = vadd.f32 %v187, %v196
    %198 = vset.pattern.permute.xlu0 3
    %199 = vperm.xlu0 %198, %v85
    %v200 = vpop.permute.xlu0 %199
    %v202 = vlaneseq
    %v203 = vshrl.u32 %v202, 7
    %v204 = vsub.s32 3, %v203
    %v205 = vrot.slane %v73, %v204
    %v206 = vmul.f32 %v200, %v205
    %v207 = vadd.f32 %v197, %v206
    %209 = vset.pattern.permute.xlu0 0
    %210 = vperm.xlu0 %209, %v86
    %v211 = vpop.permute.xlu0 %210
    %v213 = vlaneseq
    %v214 = vshrl.u32 %v213, 7
    %v215 = vsub.s32 0, %v214
    %v216 = vrot.slane %v74, %v215
    %v217 = vmul.f32 %v211, %v216
    %218 = vset.pattern.permute.xlu0 1
    %219 = vperm.xlu0 %218, %v86
    %v220 = vpop.permute.xlu0 %219
    %v222 = vlaneseq
    %v223 = vshrl.u32 %v222, 7
    %v224 = vsub.s32 1, %v223
    %v225 = vrot.slane %v74, %v224
    %v226 = vmul.f32 %v220, %v225
    %v227 = vadd.f32 %v217, %v226
    %228 = vset.pattern.permute.xlu0 2
    %229 = vperm.xlu0 %228, %v86
    %v230 = vpop.permute.xlu0 %229
    %v232 = vlaneseq
    %v233 = vshrl.u32 %v232, 7
    %v234 = vsub.s32 2, %v233
    %v235 = vrot.slane %v74, %v234
    %v236 = vmul.f32 %v230, %v235
    %v237 = vadd.f32 %v227, %v236
    %238 = vset.pattern.permute.xlu0 3
    %239 = vperm.xlu0 %238, %v86
    %v240 = vpop.permute.xlu0 %239
    %v242 = vlaneseq
    %v243 = vshrl.u32 %v242, 7
    %v244 = vsub.s32 3, %v243
    %v245 = vrot.slane %v74, %v244
    %v246 = vmul.f32 %v240, %v245
    %v247 = vadd.f32 %v237, %v246
    %v248 = vadd.f32 %v207, %v247
    %v249 = vadd.f32 %v248, %v165
    %v250 = vmul.f32 %v211, %v176
    %v251 = vmul.f32 %v220, %v185
    %v252 = vadd.f32 %v250, %v251
    %v253 = vmul.f32 %v230, %v195
    %v254 = vadd.f32 %v252, %v253
    %v255 = vmul.f32 %v240, %v205
    %v256 = vadd.f32 %v254, %v255
    %v257 = vmul.f32 %v171, %v216
    %v258 = vmul.f32 %v180, %v225
    %v259 = vadd.f32 %v257, %v258
    %v260 = vmul.f32 %v190, %v235
    %v261 = vadd.f32 %v259, %v260
    %v262 = vmul.f32 %v200, %v245
    %v263 = vadd.f32 %v261, %v262
    %v264 = vadd.f32 %v256, %v263
    %v265 = vadd.f32 %v264, %v165
    %v266 = vtanh.pop %v249
    %v267 = vtanh.pop %v265
    %v268 = vld [vmem:[%s8] sm:$0xff]
    %v269 = vld [vmem:[%s8 + $0x8] sm:$0xff]
    %v270 = vld [vmem:[%s8 + $0x10] sm:$0xff]
    %v271 = vld [vmem:[%s8 + $0x18] sm:$0xff]
    %v272 = vld [vmem:[%s9] sm:$0x1]
    %v274 = vlaneseq
    %v275 = vshrl.u32 %v274, 7
    %v276 = vsub.s32 0, %v275
    %v277 = vrot.slane %v272, %v276
    %vm279 = vcmask 261120
    %v281 = vsel %vm279, %v266, 0
    %v284 = vsel %vm279, %v267, 0
    %286 = vmatprep.subr.mxu0 0.0
    %287 = vmatpush1.msra.mxu0 %v268
    %288 = vmatprep.subr.mxu0 0.0
    %289 = vmatpush1.msra.mxu0 %v269
    %290 = vmatprep.subr.mxu0 0.0
    %291 = vmatpush1.msra.mxu0 %v270
    %292 = vmatprep.subr.mxu0 0.0
    %293 = vmatpush1.msra.mxu0 %v271
    %294 = vmatprep.subr.mxu0 0.0
    %295 = vmatpush1.msra.mxu0 0.0
    %296 = vmatprep.subr.mxu0 0.0
    %297 = vmatpush1.msra.mxu0 0.0
    %298 = vmatprep.subr.mxu0 0.0
    %299 = vmatpush1.msra.mxu0 0.0
    %300 = vmatprep.subr.mxu0 0.0
    %301 = vmatpush1.msra.mxu0 0.0
    %302 = vmatprep.subr.mxu0 0.0
    %303 = vmatpush1.msra.mxu0 0.0
    %304 = vmatprep.subr.mxu0 0.0
    %305 = vmatpush1.msra.mxu0 0.0
    %306 = vmatprep.subr.mxu0 0.0
    %307 = vmatpush1.msra.mxu0 0.0
    %308 = vmatprep.subr.mxu0 0.0
    %309 = vmatpush1.msra.mxu0 0.0
    %310 = vmatprep.subr.mxu0 0.0
    %311 = vmatpush1.msra.mxu0 0.0
    %312 = vmatprep.subr.mxu0 0.0
    %313 = vmatpush1.msra.mxu0 0.0
    %314 = vmatprep.subr.mxu0 0.0
    %315 = vmatpush1.msra.mxu0 0.0
    %316 = vmatprep.subr.mxu0 0.0
    %317 = vmatpush1.msra.mxu0 0.0
    %318 = vmatprep.subr.mxu0 0.0
    %319 = vmatpush1.msra.mxu0 0.0
    %320 = vmatprep.subr.mxu0 0.0
    %321 = vmatpush1.msra.mxu0 0.0
    %322 = vmatprep.subr.mxu0 0.0
    %323 = vmatpush1.msra.mxu0 0.0
    %324 = vmatprep.subr.mxu0 0.0
    %325 = vmatpush1.msra.mxu0 0.0
    %326 = vmatprep.subr.mxu0 0.0
    %327 = vmatpush1.msra.mxu0 0.0
    %328 = vmatprep.subr.mxu0 0.0
    %329 = vmatpush1.msra.mxu0 0.0
    %330 = vmatprep.subr.mxu0 0.0
    %331 = vmatpush1.msra.mxu0 0.0
    %332 = vmatprep.subr.mxu0 0.0
    %333 = vmatpush1.msra.mxu0 0.0
    %334 = vmatprep.subr.mxu0 0.0
    %335 = vmatpush1.msra.mxu0 0.0
    %336 = vmatprep.subr.mxu0 0.0
    %337 = vmatpush1.msra.mxu0 0.0
    %338 = vmatprep.subr.mxu0 0.0
    %339 = vmatpush1.msra.mxu0 0.0
    %340 = vmatprep.subr.mxu0 0.0
    %341 = vmatpush1.msra.mxu0 0.0
    %342 = vmatprep.subr.mxu0 0.0
    %343 = vmatpush1.msra.mxu0 0.0
    %344 = vmatprep.subr.mxu0 0.0
    %345 = vmatpush1.msra.mxu0 0.0
    %346 = vmatprep.subr.mxu0 0.0
    %347 = vmatpush1.msra.mxu0 0.0
    %348 = vmatprep.subr.mxu0 0.0
    %349 = vmatpush1.msra.mxu0 0.0
    %350 = vmatprep.mubr.f32.mxu0 0.0
    %351 = vmatmul.mubr.f32.gmra.mrb[0].mxu0 %v281
    %v352 = vpop.f32.mrb[0].mxu0
    %v353 = vadd.f32 %v277, %v352
    %v354 = vpop.f32.mrb[0].mxu0
    %355 = vmatprep.mubr.f32.mxu0 0.0
    %356 = vmatmul.mubr.f32.gmra.mrb[0].mxu0 %v284
    %v357 = vpop.f32.mrb[0].mxu0
    %v358 = vadd.f32 %v277, %v357
    %v359 = vpop.f32.mrb[0].mxu0
    %360 = vdwg.mxu0
    %v361 = vtanh.pop %v353
    %v362 = vtanh.pop %v358
    %v364 = vlaneseq
    %v365 = vshrl.u32 %v364, 7
    %v366 = vsub.s32 0, %v365
    %v367 = vrot.slane %v83, %v366
    %v369 = vmul.f32 %v361, %v367
    %v370 = vmul.f32 %v362, %v367
    %v371 = vsel %vm279, %v369, 0.0
    %372 = vadd.xlane.f32.xlu0 %v371
    %v373 = vpop.xlane.xlu0 %372
    %v374 = vsel %vm279, %v370, 0.0
    %375 = vadd.xlane.f32.xlu0 %v374
    %v376 = vpop.xlane.xlu0 %375
    %v378 = vlaneseq
    %v379 = vshrl.u32 %v378, 7
    %v380 = vsub.s32 0, %v379
    %v381 = vrot.slane %v84, %v380
    %v383 = vadd.f32 %v373, %v381
    %v384 = vadd.f32 %v376, %v381
    %v385 = vmul.f32 %v361, %v361
    %v386 = vmul.f32 %v362, %v362
    %v387 = vsub.f32 1.0, %v385
    %v388 = vsub.f32 1.0, %v386
    %v389 = vmul.f32 %v367, %v387
    %v390 = vmul.f32 %v367, %v388
    %v391 = vld [vmem:[%s10] sm:$0xff]
    %v392 = vld [vmem:[%s10 + $0x8] sm:$0xff]
    %v393 = vld [vmem:[%s10 + $0x10] sm:$0xff]
    %v394 = vld [vmem:[%s10 + $0x18] sm:$0xff]
    %v396 = vsel %vm279, %v389, 0
    %v399 = vsel %vm279, %v390, 0
    %401 = vmatprep.subr.mxu0 0.0
    %402 = vmatpush1.msra.mxu0 %v391
    %403 = vmatprep.subr.mxu0 0.0
    %404 = vmatpush1.msra.mxu0 %v392
    %405 = vmatprep.subr.mxu0 0.0
    %406 = vmatpush1.msra.mxu0 %v393
    %407 = vmatprep.subr.mxu0 0.0
    %408 = vmatpush1.msra.mxu0 %v394
    %409 = vmatprep.subr.mxu0 0.0
    %410 = vmatpush1.msra.mxu0 0.0
    %411 = vmatprep.subr.mxu0 0.0
    %412 = vmatpush1.msra.mxu0 0.0
    %413 = vmatprep.subr.mxu0 0.0
    %414 = vmatpush1.msra.mxu0 0.0
    %415 = vmatprep.subr.mxu0 0.0
    %416 = vmatpush1.msra.mxu0 0.0
    %417 = vmatprep.subr.mxu0 0.0
    %418 = vmatpush1.msra.mxu0 0.0
    %419 = vmatprep.subr.mxu0 0.0
    %420 = vmatpush1.msra.mxu0 0.0
    %421 = vmatprep.subr.mxu0 0.0
    %422 = vmatpush1.msra.mxu0 0.0
    %423 = vmatprep.subr.mxu0 0.0
    %424 = vmatpush1.msra.mxu0 0.0
    %425 = vmatprep.subr.mxu0 0.0
    %426 = vmatpush1.msra.mxu0 0.0
    %427 = vmatprep.subr.mxu0 0.0
    %428 = vmatpush1.msra.mxu0 0.0
    %429 = vmatprep.subr.mxu0 0.0
    %430 = vmatpush1.msra.mxu0 0.0
    %431 = vmatprep.subr.mxu0 0.0
    %432 = vmatpush1.msra.mxu0 0.0
    %433 = vmatprep.subr.mxu0 0.0
    %434 = vmatpush1.msra.mxu0 0.0
    %435 = vmatprep.subr.mxu0 0.0
    %436 = vmatpush1.msra.mxu0 0.0
    %437 = vmatprep.subr.mxu0 0.0
    %438 = vmatpush1.msra.mxu0 0.0
    %439 = vmatprep.subr.mxu0 0.0
    %440 = vmatpush1.msra.mxu0 0.0
    %441 = vmatprep.subr.mxu0 0.0
    %442 = vmatpush1.msra.mxu0 0.0
    %443 = vmatprep.subr.mxu0 0.0
    %444 = vmatpush1.msra.mxu0 0.0
    %445 = vmatprep.subr.mxu0 0.0
    %446 = vmatpush1.msra.mxu0 0.0
    %447 = vmatprep.subr.mxu0 0.0
    %448 = vmatpush1.msra.mxu0 0.0
    %449 = vmatprep.subr.mxu0 0.0
    %450 = vmatpush1.msra.mxu0 0.0
    %451 = vmatprep.subr.mxu0 0.0
    %452 = vmatpush1.msra.mxu0 0.0
    %453 = vmatprep.subr.mxu0 0.0
    %454 = vmatpush1.msra.mxu0 0.0
    %455 = vmatprep.subr.mxu0 0.0
    %456 = vmatpush1.msra.mxu0 0.0
    %457 = vmatprep.subr.mxu0 0.0
    %458 = vmatpush1.msra.mxu0 0.0
    %459 = vmatprep.subr.mxu0 0.0
    %460 = vmatpush1.msra.mxu0 0.0
    %461 = vmatprep.subr.mxu0 0.0
    %462 = vmatpush1.msra.mxu0 0.0
    %463 = vmatprep.subr.mxu0 0.0
    %464 = vmatpush1.msra.mxu0 0.0
    %465 = vmatprep.mubr.f32.mxu0 0.0
    %466 = vmatmul.mubr.f32.gmra.mrb[0].mxu0 %v396
    %v467 = vpop.f32.mrb[0].mxu0
    %v468 = vadd.f32 0.0, %v467
    %v469 = vpop.f32.mrb[0].mxu0
    %470 = vmatprep.mubr.f32.mxu0 0.0
    %471 = vmatmul.mubr.f32.gmra.mrb[0].mxu0 %v399
    %v472 = vpop.f32.mrb[0].mxu0
    %v473 = vadd.f32 0.0, %v472
    %v474 = vpop.f32.mrb[0].mxu0
    %475 = vdwg.mxu0
    %v476 = vmul.f32 %v266, %v266
    %v477 = vmul.f32 %v267, %v267
    %v478 = vsub.f32 1.0, %v476
    %v479 = vsub.f32 1.0, %v477
    %v480 = vmul.f32 %v468, %v478
    %v481 = vmul.f32 %v473, %v479
    %v483 = vsel %vm279, %v480, 0
    %v486 = vsel %vm279, %v481, 0
    %488 = vmatprep.subr.mxu0 0.0
    %489 = vmatpush1.msra.mxu0 %v79
    %490 = vmatprep.subr.mxu0 0.0
    %491 = vmatpush1.msra.mxu0 %v80
    %492 = vmatprep.subr.mxu0 0.0
    %493 = vmatpush1.msra.mxu0 %v81
    %494 = vmatprep.subr.mxu0 0.0
    %495 = vmatpush1.msra.mxu0 %v82
    %496 = vmatprep.subr.mxu0 0.0
    %497 = vmatpush1.msra.mxu0 0.0
    %498 = vmatprep.subr.mxu0 0.0
    %499 = vmatpush1.msra.mxu0 0.0
    %500 = vmatprep.subr.mxu0 0.0
    %501 = vmatpush1.msra.mxu0 0.0
    %502 = vmatprep.subr.mxu0 0.0
    %503 = vmatpush1.msra.mxu0 0.0
    %504 = vmatprep.subr.mxu0 0.0
    %505 = vmatpush1.msra.mxu0 0.0
    %506 = vmatprep.subr.mxu0 0.0
    %507 = vmatpush1.msra.mxu0 0.0
    %508 = vmatprep.subr.mxu0 0.0
    %509 = vmatpush1.msra.mxu0 0.0
    %510 = vmatprep.subr.mxu0 0.0
    %511 = vmatpush1.msra.mxu0 0.0
    %512 = vmatprep.subr.mxu0 0.0
    %513 = vmatpush1.msra.mxu0 0.0
    %514 = vmatprep.subr.mxu0 0.0
    %515 = vmatpush1.msra.mxu0 0.0
    %516 = vmatprep.subr.mxu0 0.0
    %517 = vmatpush1.msra.mxu0 0.0
    %518 = vmatprep.subr.mxu0 0.0
    %519 = vmatpush1.msra.mxu0 0.0
    %520 = vmatprep.subr.mxu0 0.0
    %521 = vmatpush1.msra.mxu0 0.0
    %522 = vmatprep.subr.mxu0 0.0
    %523 = vmatpush1.msra.mxu0 0.0
    %524 = vmatprep.subr.mxu0 0.0
    %525 = vmatpush1.msra.mxu0 0.0
    %526 = vmatprep.subr.mxu0 0.0
    %527 = vmatpush1.msra.mxu0 0.0
    %528 = vmatprep.subr.mxu0 0.0
    %529 = vmatpush1.msra.mxu0 0.0
    %530 = vmatprep.subr.mxu0 0.0
    %531 = vmatpush1.msra.mxu0 0.0
    %532 = vmatprep.subr.mxu0 0.0
    %533 = vmatpush1.msra.mxu0 0.0
    %534 = vmatprep.subr.mxu0 0.0
    %535 = vmatpush1.msra.mxu0 0.0
    %536 = vmatprep.subr.mxu0 0.0
    %537 = vmatpush1.msra.mxu0 0.0
    %538 = vmatprep.subr.mxu0 0.0
    %539 = vmatpush1.msra.mxu0 0.0
    %540 = vmatprep.subr.mxu0 0.0
    %541 = vmatpush1.msra.mxu0 0.0
    %542 = vmatprep.subr.mxu0 0.0
    %543 = vmatpush1.msra.mxu0 0.0
    %544 = vmatprep.subr.mxu0 0.0
    %545 = vmatpush1.msra.mxu0 0.0
    %546 = vmatprep.subr.mxu0 0.0
    %547 = vmatpush1.msra.mxu0 0.0
    %548 = vmatprep.subr.mxu0 0.0
    %549 = vmatpush1.msra.mxu0 0.0
    %550 = vmatprep.subr.mxu0 0.0
    %551 = vmatpush1.msra.mxu0 0.0
    %552 = vmatprep.mubr.f32.mxu0 0.0
    %553 = vmatmul.mubr.f32.gmra.mrb[0].mxu0 %v483
    %v554 = vpop.f32.mrb[0].mxu0
    %v555 = vadd.f32 0.0, %v554
    %v556 = vpop.f32.mrb[0].mxu0
    %557 = vmatprep.mubr.f32.mxu0 0.0
    %558 = vmatmul.mubr.f32.gmra.mrb[0].mxu0 %v486
    %v559 = vpop.f32.mrb[0].mxu0
    %v560 = vadd.f32 0.0, %v559
    %v561 = vpop.f32.mrb[0].mxu0
    %562 = vdwg.mxu0
    %v563 = vsub.f32 %v383, %v384
    %v564 = vand.u32 2147483647, %v563
    %v565 = vsub.f32 0.0, %v564
    %v566 = vmul.f32 %v565, 1.442695
    %v567 = vpow.pop %v566
    %vm568 = vcmp.ge.f32.partialorder %v563, 0.0
    %v569 = vadd.f32 %v567, 1.0
    %v570 = vrcp.pop %v569
    %v571 = vmul.f32 %v567, %v570
    %v572 = vmul.f32 1.0, %v570
    %v573 = vsel %vm568, %v571, %v572
    %575 = vrot.lane.b32.xlu0 %v560, 124
    %v576 = vpop.permute.xlu0 %575
    %v578 = vsub.f32 %v555, %v576
    %579 = vrot.lane.b32.xlu0 %v560, 4
    %v580 = vpop.permute.xlu0 %579
    %v582 = vsub.f32 %v555, %v580
    %584 = vrot.lane.b32.xlu0 %v563, 1
    %v585 = vpop.permute.xlu0 %584
    %588 = vrot.lane.b32.xlu0 %v578, 2
    %v589 = vpop.permute.xlu0 %588
    %592 = vrot.lane.b32.xlu0 %v582, 2
    %v593 = vpop.permute.xlu0 %592
    %vm595 = vcmask 7168
    %v596 = vsel %vm595, %v573, %v585
    %vm597 = vcmask 15360
    %v598 = vsel %vm597, %v596, %v589
    %vm599 = vcmask 48128
    %v600 = vsel %vm599, %v598, %v593
    %vm601 = vcmask 80896
    %602 = vst.msk [vmem:[#allocation8] sm:$0xff] %vm601, %v600
    // Predicated region
    $region62: #{tpu_custom_call.1} parent=1 // pred_check
      _
    $region63: #{tpu_custom_call.1} parent=1 // pred_check_branch
      %604 = sbr.rel (0) target = $region65
    $region64: #{tpu_custom_call.1} parent=1 // pred_region
      %s606 = ssub.s32 128, 128
      %607 = vsyncadd [#allocation5], %s606
      %s609 = sshll.u32 [#allocation8], 4
      %s610 = int_to_ptr.vmem [resolvable:$true] %s609
      %612 = dma.vmem_to_hbm [thread:$0]  %s610, 128, %s13, [#allocation5]
    $region65: #{tpu_custom_call.1} parent=1 // pred_fallthru
      _
    // Predicated region
    $region66: #{tpu_custom_call.1} parent=1 // pred_check
      _
    $region67: #{tpu_custom_call.1} parent=1 // pred_check_branch
      %614 = sbr.rel (0) target = $region69
    $region68: #{tpu_custom_call.1} parent=1 // pred_region
      %615 = dma.done [#allocation5], 128
    $region69: #{tpu_custom_call.1} parent=1 // pred_fallthru
      _
    %616 = vsyncpa [#allocation4], 1
    %617 = vsyncpa [#allocation7], 1
    %618 = vsyncpa [#allocation5], 1

</llo_original>
